<compile_context>
chip_gen: v6e
topology: v6e:2x2x1
jax: 0.10.0
libtpu: 0.0.40
codegen_flags: <defaults>
</compile_context>

<pallas_src>
import functools

import jax
import jax.numpy as jnp
from jax.experimental import pallas as pl
from jax.experimental.pallas import tpu as pltpu


def _gc_kernel(x_ref, cpack_ref, rpack_ref, o_ref, *, cr):
    x = x_ref[...]                                   # (TB, C, L) native dtype
    cp = cpack_ref[...]                              # (C, 2*cr+2) f32
    rp = rpack_ref[...]                              # (3, cr)     f32

    # Unpack the tiny parameters (static slices, no data motion).
    w1t = cp[None, :, 0:cr]                          # (1, C, cr)
    w2 = cp[None, :, cr:2 * cr]                      # (1, C, cr)
    b2 = cp[None, :, 2 * cr:2 * cr + 1]              # (1, C, 1)
    wm = cp[None, :, 2 * cr + 1:2 * cr + 2]          # (1, C, 1)
    b1 = rp[0:1][None]                               # (1, 1, cr)
    ln_w = rp[1:2][None]                             # (1, 1, cr)
    ln_b = rp[2:3][None]                             # (1, 1, cr)

    # conv_mask: 1x1 Conv1d C -> 1 == weighted channel sum.
    # Rank-1 contraction -> VPU multiply + XLU sublane reduce (MXU would run
    # at 1/128-1/256 utilization with bf16-emulation passes).  Promotes to f32.
    m = jnp.sum(x * wm, axis=1, keepdims=True)       # (TB, 1, L) f32
    # NOTE: conv_mask bias omitted -- softmax over L is shift-invariant.

    # softmax over L (dim=2 of the PyTorch module)
    m = m - jnp.max(m, axis=-1, keepdims=True)
    e = jnp.exp(m)                                                       # EUP
    p = e * pl.reciprocal(jnp.sum(e, axis=-1, keepdims=True),
                          approx=False)              # (TB, 1, L)

    # spatial pooling: ctx[b, c] = sum_l x[b, c, l] * p[b, l]
    # Rank-1 again -> VPU multiply + XLU lane reduce, f32 accumulation.
    ctx = jnp.sum(x * p, axis=-1, keepdims=True)     # (TB, C, 1) f32

    # channel_att conv1: 1x1 Conv1d C -> Cr (tiny; exact f32 VPU + XLU reduce)
    h = jnp.sum(ctx * w1t, axis=1, keepdims=True) + b1   # (TB, 1, cr)

    # LayerNorm([Cr, 1]): biased variance over the Cr elements, eps=1e-5
    mu = jnp.mean(h, axis=-1, keepdims=True)
    var = jnp.mean((h - mu) ** 2, axis=-1, keepdims=True)
    h = (h - mu) * jax.lax.rsqrt(var + 1e-5)
    h = h * ln_w + ln_b
    h = jnp.maximum(h, 0.0)                              # ReLU

    # channel_att conv2: 1x1 Conv1d Cr -> C
    att = jnp.sum(h * w2, axis=-1, keepdims=True) + b2   # (TB, C, 1) f32

    # mode='mul': gate in the input dtype (no full-precision copy of x).
    gate = jax.nn.sigmoid(att).astype(x.dtype)           # sigmoid -> EUP
    o_ref[...] = (x * gate).astype(o_ref.dtype)


def _vmem_capacity_bytes():
    try:
        info = pltpu.get_tpu_info()
        cap = getattr(info, "vmem_capacity_bytes", None)
        if cap:
            return int(cap)
    except Exception:
        pass
    return 64 * 1024 * 1024      # conservative: v7x per-TC VMEM


def _pick_tile(batch, c, l, itemsize):
    """Batch-tile size TB and an explicit VMEM limit.

    Per batch row the kernel needs: double-buffered input + double-buffered
    output (native dtype) plus two full-size f32 intermediates (x*w_mask and
    x*p before their reductions).  Target ~8 MiB f32 tiles on 64 MiB-VMEM
    parts and ~14 MiB on 128 MiB parts, keep >= 4 grid steps when batch
    allows (pipelining / v7x megacore balance), and leave headroom for
    Mosaic scratch.
    """
    cap = _vmem_capacity_bytes()
    limit_cap = (cap * 3) // 4                       # 48 MiB (v7x) / 96 MiB (v5e/v6e)
    headroom = 4 * 1024 * 1024
    per_tb = c * l * (4 * itemsize + 2 * 4)          # bytes of VMEM per batch row
    target_f32 = (8 if cap <= 64 * 1024 * 1024 else 14) * 1024 * 1024

    tb = max(1, min((limit_cap - headroom) // per_tb,
                    target_f32 // max(1, c * l * 4)))
    if batch >= 4:
        tb = min(tb, pl.cdiv(batch, 4))              # >= 4 grid steps
    tb = max(1, min(tb, batch))

    vmem_limit = int(min(limit_cap, max(16 * 1024 * 1024,
                                        per_tb * tb + headroom)))
    return int(tb), vmem_limit


def gc_module_pallas(x, params):
    B, C, L = x.shape
    Cr = params["w1t"].shape[1]

    # Pack the tiny parameters: one channel-major pack and one row pack
    # (grid-invariant index maps -> fetched once).
    cpack = jnp.concatenate(
        [params["w1t"], params["w2"], params["b2"], params["w_mask"]],
        axis=1).astype(jnp.float32)                  # (C, 2*Cr+2)
    rpack = jnp.concatenate(
        [params["b1"], params["ln_w"], params["ln_b"]],
        axis=0).astype(jnp.float32)                  # (3, Cr)

    TB, vmem_limit = _pick_tile(B, C, L, x.dtype.itemsize)
    grid = pl.cdiv(B, TB)   # ragged last block; batches are independent, and
                            # out-of-bounds rows are dropped on store.

    kernel = functools.partial(_gc_kernel, cr=Cr)

    return pl.pallas_call(
        kernel,
        out_shape=jax.ShapeDtypeStruct((B, C, L), x.dtype),
        grid_spec=pltpu.PrefetchScalarGridSpec(
            num_scalar_prefetch=0,
            grid=(grid,),
            in_specs=[
                # (C, L) are the full array extents -> exempt from (8,128).
                pl.BlockSpec((TB, C, L), lambda b: (b, 0, 0)),        # x slab
                pl.BlockSpec((C, 2 * Cr + 2), lambda b: (0, 0)),      # w1t|w2|b2|w_mask
                pl.BlockSpec((3, Cr), lambda b: (0, 0)),              # b1|ln_w|ln_b
            ],
            out_specs=pl.BlockSpec((TB, C, L), lambda b: (b, 0, 0)),
        ),
        compiler_params=pltpu.CompilerParams(
            dimension_semantics=("parallel",),
            vmem_limit_bytes=vmem_limit),
    )(x, cpack, rpack)


def gc_module_ref(x, p):
    """Pure-JAX reference mirroring the PyTorch forward (f32, highest precision)."""
    hp = jax.lax.Precision.HIGHEST
    m = jnp.einsum("bcl,c->bl", x, p["w_mask"][:, 0],
                   precision=hp) + p["b_mask"][0, 0]
    w = jax.nn.softmax(m, axis=-1)
    ctx = jnp.einsum("bcl,bl->bc", x, w, precision=hp)            # (B, C)
    h = jnp.einsum("bc,cr->br", ctx, p["w1t"], precision=hp) + p["b1"][0]
    mu = jnp.mean(h, axis=-1, keepdims=True)
    var = jnp.mean((h - mu) ** 2, axis=-1, keepdims=True)
    h = (h - mu) / jnp.sqrt(var + 1e-5) * p["ln_w"][0] + p["ln_b"][0]
    h = jax.nn.relu(h)
    att = jnp.einsum("br,cr->bc", h, p["w2"], precision=hp) + p["b2"][:, 0]
    return x * jax.nn.sigmoid(att)[:, :, None]


def init_params(key, channels, reduction):
    cr = channels // reduction
    ks = jax.random.split(key, 9)
    u = lambda k, shape, scale: jax.random.uniform(
        k, shape, jnp.float32, -scale, scale)
    return {
        # conv_mask: Conv1d(C, 1, k=1)  weight (1, C, 1) -> stored (C, 1)
        "w_mask": u(ks[0], (channels, 1), (1.0 / channels) ** 0.5),
        "b_mask": u(ks[1], (1, 1), (1.0 / channels) ** 0.5),
        # channel_att[0]: Conv1d(C, Cr, k=1) weight (Cr, C, 1) -> stored (C, Cr)
        "w1t": u(ks[2], (channels, cr), (1.0 / channels) ** 0.5),
        "b1": u(ks[3], (1, cr), (1.0 / channels) ** 0.5),
        # LayerNorm([Cr, 1]) affine params -> stored (1, Cr)
        "ln_w": jnp.ones((1, cr), jnp.float32),
        "ln_b": jnp.zeros((1, cr), jnp.float32),
        # channel_att[3]: Conv1d(Cr, C, k=1) weight (C, Cr, 1) -> stored (C, Cr)
        "w2": u(ks[4], (channels, cr), (1.0 / cr) ** 0.5),
        "b2": u(ks[5], (channels, 1), (1.0 / cr) ** 0.5),
    }


if __name__ == "__main__":
    B, C, L, reduction = 2, 32, 128, 16
    key = jax.random.PRNGKey(0)
    k_x, k_p = jax.random.split(key)
    x = jax.random.normal(k_x, (B, C, L), jnp.float32)
    params = init_params(k_p, C, reduction)

    out = gc_module_pallas(x, params)
    out = jax.block_until_ready(out)

    ref = gc_module_ref(x, params)
    assert out.shape == (B, C, L)
    # Kernel reductions are exact f32 (VPU/XLU); the only deviation vs. the
    # reference is rounding of the (mathematically cancelling) conv_mask bias
    # and reduction order -- expected error ~1e-6.
    err = float(jnp.max(jnp.abs(out - ref)))
    assert jnp.allclose(out, ref, atol=1e-3, rtol=1e-3), err

    print("KERNEL_OK")
</pallas_src>

<mosaic_0001>
module attributes {stable_mosaic.version = 11 : i64} {
  func.func @_gc_kernel(%arg0: i32, %arg1: memref<2x32x128xf32, #tpu.memory_space<vmem>>, %arg2: memref<32x6xf32, #tpu.memory_space<vmem>>, %arg3: memref<3x2xf32, #tpu.memory_space<vmem>>, %arg4: memref<2x32x128xf32, #tpu.memory_space<vmem>>) attributes {dimension_semantics = [#tpu.dimension_semantics<parallel>], iteration_bounds = array<i64: 1>, scalar_prefetch = 0 : i64, scratch_operands = 0 : i64, tpu.core_type = #tpu.core_type<tc>, window_params = [{transform_indices = @transform_0, window_bounds = array<i64: 2, 32, 128>}, {pipeline_mode = #tpu.pipeline_mode<synchronous>, transform_indices = @transform_1, window_bounds = array<i64: 32, 6>}, {pipeline_mode = #tpu.pipeline_mode<synchronous>, transform_indices = @transform_2, window_bounds = array<i64: 3, 2>}, {transform_indices = @transform_3, window_bounds = array<i64: 2, 32, 128>}]} {
    %c0 = arith.constant 0 : index
    %c0_0 = arith.constant 0 : index
    %c0_1 = arith.constant 0 : index
    %0 = vector.load %arg1[%c0, %c0_0, %c0_1] : memref<2x32x128xf32, #tpu.memory_space<vmem>>, vector<2x32x128xf32>
    %c0_2 = arith.constant 0 : index
    %c0_3 = arith.constant 0 : index
    %1 = vector.load %arg2[%c0_2, %c0_3] : memref<32x6xf32, #tpu.memory_space<vmem>>, vector<32x6xf32>
    %c0_4 = arith.constant 0 : index
    %c0_5 = arith.constant 0 : index
    %2 = vector.load %arg3[%c0_4, %c0_5] : memref<3x2xf32, #tpu.memory_space<vmem>>, vector<3x2xf32>
    %3 = vector.extract_strided_slice %1 {offsets = [0, 0], sizes = [32, 2], strides = [1, 1]} : vector<32x6xf32> to vector<32x2xf32>
    %4 = vector.shape_cast %3 : vector<32x2xf32> to vector<1x32x2xf32>
    %5 = vector.extract_strided_slice %1 {offsets = [0, 2], sizes = [32, 2], strides = [1, 1]} : vector<32x6xf32> to vector<32x2xf32>
    %6 = vector.shape_cast %5 : vector<32x2xf32> to vector<1x32x2xf32>
    %7 = vector.extract_strided_slice %1 {offsets = [0, 4], sizes = [32, 1], strides = [1, 1]} : vector<32x6xf32> to vector<32x1xf32>
    %8 = vector.shape_cast %7 : vector<32x1xf32> to vector<1x32x1xf32>
    %9 = vector.extract_strided_slice %1 {offsets = [0, 5], sizes = [32, 1], strides = [1, 1]} : vector<32x6xf32> to vector<32x1xf32>
    %10 = vector.shape_cast %9 : vector<32x1xf32> to vector<1x32x1xf32>
    %11 = vector.extract_strided_slice %2 {offsets = [0, 0], sizes = [1, 2], strides = [1, 1]} : vector<3x2xf32> to vector<1x2xf32>
    %12 = vector.shape_cast %11 : vector<1x2xf32> to vector<1x1x2xf32>
    %13 = vector.extract_strided_slice %2 {offsets = [1, 0], sizes = [1, 2], strides = [1, 1]} : vector<3x2xf32> to vector<1x2xf32>
    %14 = vector.shape_cast %13 : vector<1x2xf32> to vector<1x1x2xf32>
    %15 = vector.extract_strided_slice %2 {offsets = [2, 0], sizes = [1, 2], strides = [1, 1]} : vector<3x2xf32> to vector<1x2xf32>
    %16 = vector.shape_cast %15 : vector<1x2xf32> to vector<1x1x2xf32>
    %17 = vector.broadcast %10 : vector<1x32x1xf32> to vector<2x32x128xf32>
    %18 = arith.mulf %0, %17 : vector<2x32x128xf32>
    %cst = arith.constant dense<0.000000e+00> : vector<2x128xf32>
    %19 = vector.multi_reduction <add>, %18, %cst [1] : vector<2x32x128xf32> to vector<2x128xf32>
    %20 = vector.shape_cast %19 : vector<2x128xf32> to vector<2x1x128xf32>
    %cst_6 = arith.constant dense<0xFF800000> : vector<2x1xf32>
    %21 = vector.multi_reduction <maximumf>, %20, %cst_6 [2] : vector<2x1x128xf32> to vector<2x1xf32>
    %22 = vector.shape_cast %21 : vector<2x1xf32> to vector<2x1x1xf32>
    %23 = vector.broadcast %22 : vector<2x1x1xf32> to vector<2x1x128xf32>
    %24 = arith.subf %20, %23 : vector<2x1x128xf32>
    %25 = math.exp %24 : vector<2x1x128xf32>
    %cst_7 = arith.constant dense<0.000000e+00> : vector<2x1xf32>
    %26 = vector.multi_reduction <add>, %25, %cst_7 [2] : vector<2x1x128xf32> to vector<2x1xf32>
    %27 = vector.shape_cast %26 : vector<2x1xf32> to vector<2x1x1xf32>
    %28 = tpu.reciprocal %27 : vector<2x1x1xf32> -> vector<2x1x1xf32>
    %29 = vector.broadcast %28 : vector<2x1x1xf32> to vector<2x1x128xf32>
    %30 = arith.mulf %25, %29 : vector<2x1x128xf32>
    %31 = vector.broadcast %30 : vector<2x1x128xf32> to vector<2x32x128xf32>
    %32 = arith.mulf %0, %31 : vector<2x32x128xf32>
    %cst_8 = arith.constant dense<0.000000e+00> : vector<2x32xf32>
    %33 = vector.multi_reduction <add>, %32, %cst_8 [2] : vector<2x32x128xf32> to vector<2x32xf32>
    %34 = vector.shape_cast %33 : vector<2x32xf32> to vector<2x32x1xf32>
    %35 = vector.broadcast %34 : vector<2x32x1xf32> to vector<2x32x2xf32>
    %36 = vector.broadcast %4 : vector<1x32x2xf32> to vector<2x32x2xf32>
    %37 = arith.mulf %35, %36 : vector<2x32x2xf32>
    %cst_9 = arith.constant dense<0.000000e+00> : vector<2x2xf32>
    %38 = vector.multi_reduction <add>, %37, %cst_9 [1] : vector<2x32x2xf32> to vector<2x2xf32>
    %39 = vector.shape_cast %38 : vector<2x2xf32> to vector<2x1x2xf32>
    %40 = vector.broadcast %12 : vector<1x1x2xf32> to vector<2x1x2xf32>
    %41 = arith.addf %39, %40 : vector<2x1x2xf32>
    %cst_10 = arith.constant dense<0.000000e+00> : vector<2x1xf32>
    %42 = vector.multi_reduction <add>, %41, %cst_10 [2] : vector<2x1x2xf32> to vector<2x1xf32>
    %43 = vector.shape_cast %42 : vector<2x1xf32> to vector<2x1x1xf32>
    %cst_11 = arith.constant 2.000000e+00 : f32
    %44 = vector.broadcast %cst_11 : f32 to vector<2x1x1xf32>
    %45 = arith.divf %43, %44 : vector<2x1x1xf32>
    %46 = vector.broadcast %45 : vector<2x1x1xf32> to vector<2x1x2xf32>
    %47 = arith.subf %41, %46 : vector<2x1x2xf32>
    %48 = arith.mulf %47, %47 : vector<2x1x2xf32>
    %cst_12 = arith.constant dense<0.000000e+00> : vector<2x1xf32>
    %49 = vector.multi_reduction <add>, %48, %cst_12 [2] : vector<2x1x2xf32> to vector<2x1xf32>
    %50 = vector.shape_cast %49 : vector<2x1xf32> to vector<2x1x1xf32>
    %cst_13 = arith.constant 2.000000e+00 : f32
    %51 = vector.broadcast %cst_13 : f32 to vector<2x1x1xf32>
    %52 = arith.divf %50, %51 : vector<2x1x1xf32>
    %53 = vector.broadcast %45 : vector<2x1x1xf32> to vector<2x1x2xf32>
    %54 = arith.subf %41, %53 : vector<2x1x2xf32>
    %cst_14 = arith.constant 9.99999974E-6 : f32
    %55 = vector.broadcast %cst_14 : f32 to vector<2x1x1xf32>
    %56 = arith.addf %52, %55 : vector<2x1x1xf32>
    %57 = math.rsqrt %56 : vector<2x1x1xf32>
    %58 = vector.broadcast %57 : vector<2x1x1xf32> to vector<2x1x2xf32>
    %59 = arith.mulf %54, %58 : vector<2x1x2xf32>
    %60 = vector.broadcast %14 : vector<1x1x2xf32> to vector<2x1x2xf32>
    %61 = arith.mulf %59, %60 : vector<2x1x2xf32>
    %62 = vector.broadcast %16 : vector<1x1x2xf32> to vector<2x1x2xf32>
    %63 = arith.addf %61, %62 : vector<2x1x2xf32>
    %cst_15 = arith.constant 0.000000e+00 : f32
    %64 = vector.broadcast %cst_15 : f32 to vector<2x1x2xf32>
    %65 = arith.maximumf %63, %64 : vector<2x1x2xf32>
    %66 = vector.broadcast %65 : vector<2x1x2xf32> to vector<2x32x2xf32>
    %67 = vector.broadcast %6 : vector<1x32x2xf32> to vector<2x32x2xf32>
    %68 = arith.mulf %66, %67 : vector<2x32x2xf32>
    %cst_16 = arith.constant dense<0.000000e+00> : vector<2x32xf32>
    %69 = vector.multi_reduction <add>, %68, %cst_16 [2] : vector<2x32x2xf32> to vector<2x32xf32>
    %70 = vector.shape_cast %69 : vector<2x32xf32> to vector<2x32x1xf32>
    %71 = vector.broadcast %8 : vector<1x32x1xf32> to vector<2x32x1xf32>
    %72 = arith.addf %70, %71 : vector<2x32x1xf32>
    %73 = arith.negf %72 : vector<2x32x1xf32>
    %74 = math.exp %73 : vector<2x32x1xf32>
    %cst_17 = arith.constant 1.000000e+00 : f32
    %75 = vector.broadcast %cst_17 : f32 to vector<2x32x1xf32>
    %76 = arith.addf %75, %74 : vector<2x32x1xf32>
    %77 = arith.divf %75, %76 : vector<2x32x1xf32>
    %78 = vector.broadcast %77 : vector<2x32x1xf32> to vector<2x32x128xf32>
    %79 = arith.mulf %0, %78 : vector<2x32x128xf32>
    %c0_18 = arith.constant 0 : index
    %c0_19 = arith.constant 0 : index
    %c0_20 = arith.constant 0 : index
    %80 = vector.load %arg4[%c0_18, %c0_19, %c0_20] : memref<2x32x128xf32, #tpu.memory_space<vmem>>, vector<2x32x128xf32>
    tpu.vector_store %arg4[%c0_18, %c0_19, %c0_20], %79 {strides = array<i32>} : memref<2x32x128xf32, #tpu.memory_space<vmem>>, vector<2x32x128xf32>,
    return
  }
  func.func @transform_0(%arg0: i32) -> (i32, i32, i32) {
    %c0_i32 = arith.constant 0 : i32
    %c0_i32_0 = arith.constant 0 : i32
    %c0_i32_1 = arith.constant 0 : i32
    return %arg0, %c0_i32, %c0_i32_0 : i32, i32, i32
  }
  func.func @transform_1(%arg0: i32) -> (i32, i32) {
    %c0_i32 = arith.constant 0 : i32
    %c0_i32_0 = arith.constant 0 : i32
    %c0_i32_1 = arith.constant 0 : i32
    return %c0_i32, %c0_i32_0 : i32, i32
  }
  func.func @transform_2(%arg0: i32) -> (i32, i32) {
    %c0_i32 = arith.constant 0 : i32
    %c0_i32_0 = arith.constant 0 : i32
    %c0_i32_1 = arith.constant 0 : i32
    return %c0_i32, %c0_i32_0 : i32, i32
  }
  func.func @transform_3(%arg0: i32) -> (i32, i32, i32) {
    %c0_i32 = arith.constant 0 : i32
    %c0_i32_0 = arith.constant 0 : i32
    %c0_i32_1 = arith.constant 0 : i32
    return %arg0, %c0_i32, %c0_i32_0 : i32, i32, i32
  }
}

</mosaic_0001>

<llo_original>
// kernel: tpu_custom_call.1
$region0: #{tpu_custom_call.1}
  #allocation0 [shape = 'u32[]', space=smem, size = 0x4, offset = 0x4, fixed_abs, tag = 'smem constant byte address 0x4 - core index']
  #allocation1 [shape = 'u32[144,128]{1,0:T(1,128)}', space=vmem, size = 0x12000, scoped, tag = 'internal scratch']
  %s0 = inlined_call_operand.hbm [shape: f32[2,32,128], index: 0, kind: input, shape index: {}]
  %s1 = inlined_call_operand.vmem [shape: f32[32,6], index: 1, kind: input, shape index: {}]
  %s2 = inlined_call_operand.vmem [shape: f32[3,2], index: 2, kind: input, shape index: {}]
  %s3 = inlined_call_operand.hbm [shape: f32[2,32,128], index: 3, kind: output, shape index: {}]
  %s4 = sld [smem:[#allocation0]]
  $region26: #{tpu_custom_call.1} parent=0
    _
  %s6 = ssub.s32 1, %s4
  %s7 = scalar_select 0, %s6, %s4
  $region1: #{tpu_custom_call.1} parent=0
    #allocation2 [shape = 'u8[32768]{0}', space=vmem, size = 0x8000, scoped, tag = 'input window, operand 0, single buffered']
    #allocation3 [shape = 's32[1]{0}', space=sflag, size = 0x4, scoped, tag = 'scoped memory for tpu_custom_call.1']
    #allocation4 [shape = 's32[1]{0}', space=sflag, size = 0x4, scoped, tag = 'scoped memory for tpu_custom_call.1']
    #allocation5 [shape = 'u8[32768]{0}', space=vmem, size = 0x8000, scoped, tag = 'output window, operand 0, single buffered']
    %8 = vsyncpa [#allocation3], 0
    %9 = vsyncpa [#allocation4], 0
    // Predicated region
    $region2: #{tpu_custom_call.1} parent=1 // pred_check
      _
    $region3: #{tpu_custom_call.1} parent=1 // pred_check_branch
      %11 = sbr.rel (0) target = $region5
    $region4: #{tpu_custom_call.1} parent=1 // pred_region
      %s13 = ssub.s32 1024, 1024
      %14 = vsyncadd [#allocation3], %s13
      %s15 = sshll.u32 [#allocation2], 4
      %s16 = int_to_ptr.vmem [resolvable:$true] %s15
      %21 = dma.hbm_to_vmem [thread:$0]  %s0, 1024, %s16, [#allocation3], 128, 128, 8
    $region5: #{tpu_custom_call.1} parent=1 // pred_fallthru
      _
    // Predicated region
    $region6: #{tpu_custom_call.1} parent=1 // pred_check
      _
    $region7: #{tpu_custom_call.1} parent=1 // pred_check_branch
      %23 = sbr.rel (0) target = $region9
    $region8: #{tpu_custom_call.1} parent=1 // pred_region
      _
    $region9: #{tpu_custom_call.1} parent=1 // pred_fallthru
      _
    // Predicated region
    $region10: #{tpu_custom_call.1} parent=1 // pred_check
      _
    $region11: #{tpu_custom_call.1} parent=1 // pred_check_branch
      %25 = sbr.rel (0) target = $region13
    $region12: #{tpu_custom_call.1} parent=1 // pred_region
      _
    $region13: #{tpu_custom_call.1} parent=1 // pred_fallthru
      _
    // Predicated region
    $region14: #{tpu_custom_call.1} parent=1 // pred_check
      _
    $region15: #{tpu_custom_call.1} parent=1 // pred_check_branch
      %27 = sbr.rel (0) target = $region17
    $region16: #{tpu_custom_call.1} parent=1 // pred_region
      %28 = dma.done [#allocation3], 1024
    $region17: #{tpu_custom_call.1} parent=1 // pred_fallthru
      _
    %v29 = vld [vmem:[#allocation2] sm:$0xff]
    %v30 = vld [vmem:[#allocation2 + $0x8] sm:$0xff]
    %v31 = vld [vmem:[#allocation2 + $0x10] sm:$0xff]
    %v32 = vld [vmem:[#allocation2 + $0x18] sm:$0xff]
    %v33 = vld [vmem:[#allocation2 + $0x20] sm:$0xff]
    %v34 = vld [vmem:[#allocation2 + $0x28] sm:$0xff]
    %v35 = vld [vmem:[#allocation2 + $0x30] sm:$0xff]
    %v36 = vld [vmem:[#allocation2 + $0x38] sm:$0xff]
    %v37 = vld [vmem:[%s1] sm:$0xff]
    %v38 = vld [vmem:[%s1 + $0x8] sm:$0xff]
    %v39 = vld [vmem:[%s1 + $0x10] sm:$0xff]
    %v40 = vld [vmem:[%s1 + $0x18] sm:$0xff]
    %v41 = vld [vmem:[%s2] sm:$0x7]
    %43 = vset.pattern.permute.xlu0 5
    %44 = vperm.xlu0 %43, %v37
    %v45 = vpop.permute.xlu0 %44
    %48 = vset.pattern.permute.xlu0 5
    %49 = vperm.xlu0 %48, %v38
    %v50 = vpop.permute.xlu0 %49
    %53 = vset.pattern.permute.xlu0 5
    %54 = vperm.xlu0 %53, %v39
    %v55 = vpop.permute.xlu0 %54
    %58 = vset.pattern.permute.xlu0 5
    %59 = vperm.xlu0 %58, %v40
    %v60 = vpop.permute.xlu0 %59
    %v62 = vmul.f32 %v29, %v45
    %v63 = vmul.f32 %v30, %v50
    %v64 = vmul.f32 %v31, %v55
    %v65 = vmul.f32 %v32, %v60
    %v66 = vmul.f32 %v33, %v45
    %v67 = vmul.f32 %v34, %v50
    %v68 = vmul.f32 %v35, %v55
    %v69 = vmul.f32 %v36, %v60
    %v70 = vadd.f32 %v62, %v63
    %v71 = vadd.f32 %v70, %v64
    %v72 = vadd.f32 %v71, %v65
    %v73 = vrot.slane %v72, 4
    %v74 = vadd.f32 %v72, %v73
    %v75 = vrot.slane %v74, 2
    %v76 = vadd.f32 %v74, %v75
    %v77 = vrot.slane %v76, 1
    %v78 = vadd.f32 %v76, %v77
    %v79 = vadd.f32 %v66, %v67
    %v80 = vadd.f32 %v79, %v68
    %v81 = vadd.f32 %v80, %v69
    %v82 = vrot.slane %v81, 4
    %v83 = vadd.f32 %v81, %v82
    %v84 = vrot.slane %v83, 2
    %v85 = vadd.f32 %v83, %v84
    %v86 = vrot.slane %v85, 1
    %v87 = vadd.f32 %v85, %v86
    %88 = vmax.xlane.f32.xlu0 %v78
    %v89 = vpop.xlane.xlu0 %88
    %90 = vmax.xlane.f32.xlu0 %v87
    %v91 = vpop.xlane.xlu0 %90
    %v92 = vsub.f32 %v78, %v89
    %v93 = vsub.f32 %v87, %v91
    %v94 = vmul.f32 %v92, 1.442695
    %v95 = vpow.pop %v94
    %v96 = vmul.f32 %v93, 1.442695
    %v97 = vpow.pop %v96
    %98 = vadd.xlane.f32.xlu0 %v95
    %v99 = vpop.xlane.xlu0 %98
    %100 = vadd.xlane.f32.xlu0 %v97
    %v101 = vpop.xlane.xlu0 %100
    %v102 = vrcp.pop %v99
    %v103 = vrcp.pop %v101
    %v104 = vmul.f32 %v95, %v102
    %v105 = vmul.f32 %v97, %v103
    %v106 = vmul.f32 %v29, %v104
    %v107 = vmul.f32 %v30, %v104
    %v108 = vmul.f32 %v31, %v104
    %v109 = vmul.f32 %v32, %v104
    %v110 = vmul.f32 %v33, %v105
    %v111 = vmul.f32 %v34, %v105
    %v112 = vmul.f32 %v35, %v105
    %v113 = vmul.f32 %v36, %v105
    %114 = vadd.xlane.f32.xlu0 %v106
    %v115 = vpop.xlane.xlu0 %114
    %116 = vadd.xlane.f32.xlu0 %v107
    %v117 = vpop.xlane.xlu0 %116
    %118 = vadd.xlane.f32.xlu0 %v108
    %v119 = vpop.xlane.xlu0 %118
    %120 = vadd.xlane.f32.xlu0 %v109
    %v121 = vpop.xlane.xlu0 %120
    %122 = vadd.xlane.f32.xlu0 %v110
    %v123 = vpop.xlane.xlu0 %122
    %124 = vadd.xlane.f32.xlu0 %v111
    %v125 = vpop.xlane.xlu0 %124
    %126 = vadd.xlane.f32.xlu0 %v112
    %v127 = vpop.xlane.xlu0 %126
    %128 = vadd.xlane.f32.xlu0 %v113
    %v129 = vpop.xlane.xlu0 %128
    %v130 = vmul.f32 %v115, %v37
    %v131 = vmul.f32 %v117, %v38
    %v132 = vmul.f32 %v119, %v39
    %v133 = vmul.f32 %v121, %v40
    %v134 = vmul.f32 %v123, %v37
    %v135 = vmul.f32 %v125, %v38
    %v136 = vmul.f32 %v127, %v39
    %v137 = vmul.f32 %v129, %v40
    %vm138 = vcmask 15360
    %v139 = vsel %vm138, %v130, 0.0
    %v140 = vsel %vm138, %v131, 0.0
    %v141 = vadd.f32 %v139, %v140
    %v142 = vsel %vm138, %v132, 0.0
    %v143 = vadd.f32 %v141, %v142
    %v144 = vsel %vm138, %v133, 0.0
    %v145 = vadd.f32 %v143, %v144
    %v146 = vrot.slane %v145, 4
    %v147 = vadd.f32 %v145, %v146
    %v148 = vrot.slane %v147, 2
    %v149 = vadd.f32 %v147, %v148
    %v150 = vrot.slane %v149, 1
    %v151 = vadd.f32 %v149, %v150
    %v152 = vsel %vm138, %v134, 0.0
    %v153 = vsel %vm138, %v135, 0.0
    %v154 = vadd.f32 %v152, %v153
    %v155 = vsel %vm138, %v136, 0.0
    %v156 = vadd.f32 %v154, %v155
    %v157 = vsel %vm138, %v137, 0.0
    %v158 = vadd.f32 %v156, %v157
    %v159 = vrot.slane %v158, 4
    %v160 = vadd.f32 %v158, %v159
    %v161 = vrot.slane %v160, 2
    %v162 = vadd.f32 %v160, %v161
    %v163 = vrot.slane %v162, 1
    %v164 = vadd.f32 %v162, %v163
    %v165 = vadd.f32 %v151, %v41
    %v166 = vadd.f32 %v164, %v41
    %vm167 = vcmask 8192
    %v168 = vsel %vm167, %v165, 0.0
    %169 = vadd.xlane.f32.xlu0 %v168
    %v170 = vpop.xlane.xlu0 %169
    %v171 = vsel %vm167, %v166, 0.0
    %172 = vadd.xlane.f32.xlu0 %v171
    %v173 = vpop.xlane.xlu0 %172
    %v174 = vrcp.pop 2.0
    %v175 = vmul.f32 %v170, %v174
    %v176 = vmul.f32 %v173, %v174
    %v177 = vsub.f32 %v165, %v175
    %v178 = vsub.f32 %v166, %v176
    %v179 = vmul.f32 %v177, %v177
    %v180 = vmul.f32 %v178, %v178
    %v181 = vsel %vm167, %v179, 0.0
    %182 = vadd.xlane.f32.xlu0 %v181
    %v183 = vpop.xlane.xlu0 %182
    %v184 = vsel %vm167, %v180, 0.0
    %185 = vadd.xlane.f32.xlu0 %v184
    %v186 = vpop.xlane.xlu0 %185
    %v187 = vmul.f32 %v183, %v174
    %v188 = vmul.f32 %v186, %v174
    %v189 = vadd.f32 %v187, 1e-05
    %v190 = vadd.f32 %v188, 1e-05
    %v191 = vrsqrt.pop %v189
    %v192 = vrsqrt.pop %v190
    %v193 = vmul.f32 %v177, %v191
    %v194 = vmul.f32 %v178, %v192
    %v196 = vrot.slane %v41, 1
    %v198 = vmul.f32 %v193, %v196
    %v199 = vmul.f32 %v194, %v196
    %v200 = vrot.slane %v41, 2
    %v202 = vadd.f32 %v198, %v200
    %v203 = vadd.f32 %v199, %v200
    %v204 = vmax.f32 %v202, 0.0
    %v205 = vmax.f32 %v203, 0.0
    %v206 = vlaneseq
    %v207 = vshrl.u32 %v206, 7
    %v208 = vsub.s32 0, %v207
    %v209 = vrot.slane %v204, %v208
    %v210 = vlaneseq
    %v211 = vshrl.u32 %v210, 7
    %v212 = vsub.s32 0, %v211
    %v213 = vrot.slane %v205, %v212
    %214 = vrot.lane.b32.xlu0 %v37, 126
    %v215 = vpop.permute.xlu0 %214
    %216 = vrot.lane.b32.xlu0 %v38, 126
    %v217 = vpop.permute.xlu0 %216
    %218 = vrot.lane.b32.xlu0 %v39, 126
    %v219 = vpop.permute.xlu0 %218
    %220 = vrot.lane.b32.xlu0 %v40, 126
    %v221 = vpop.permute.xlu0 %220
    %v226 = vmul.f32 %v209, %v215
    %v227 = vmul.f32 %v209, %v217
    %v228 = vmul.f32 %v209, %v219
    %v229 = vmul.f32 %v209, %v221
    %v230 = vmul.f32 %v213, %v215
    %v231 = vmul.f32 %v213, %v217
    %v232 = vmul.f32 %v213, %v219
    %v233 = vmul.f32 %v213, %v221
    %v234 = vsel %vm138, %v226, 0.0
    %235 = vadd.xlane.f32.xlu0 %v234
    %v236 = vpop.xlane.xlu0 %235
    %v237 = vsel %vm138, %v227, 0.0
    %238 = vadd.xlane.f32.xlu0 %v237
    %v239 = vpop.xlane.xlu0 %238
    %v240 = vsel %vm138, %v228, 0.0
    %241 = vadd.xlane.f32.xlu0 %v240
    %v242 = vpop.xlane.xlu0 %241
    %v243 = vsel %vm138, %v229, 0.0
    %244 = vadd.xlane.f32.xlu0 %v243
    %v245 = vpop.xlane.xlu0 %244
    %v246 = vsel %vm138, %v230, 0.0
    %247 = vadd.xlane.f32.xlu0 %v246
    %v248 = vpop.xlane.xlu0 %247
    %v249 = vsel %vm138, %v231, 0.0
    %250 = vadd.xlane.f32.xlu0 %v249
    %v251 = vpop.xlane.xlu0 %250
    %v252 = vsel %vm138, %v232, 0.0
    %253 = vadd.xlane.f32.xlu0 %v252
    %v254 = vpop.xlane.xlu0 %253
    %v255 = vsel %vm138, %v233, 0.0
    %256 = vadd.xlane.f32.xlu0 %v255
    %v257 = vpop.xlane.xlu0 %256
    %v258 = vadd.f32 %v236, %v37
    %v259 = vadd.f32 %v239, %v38
    %v260 = vadd.f32 %v242, %v39
    %v261 = vadd.f32 %v245, %v40
    %v262 = vadd.f32 %v248, %v37
    %v263 = vadd.f32 %v251, %v38
    %v264 = vadd.f32 %v254, %v39
    %v265 = vadd.f32 %v257, %v40
    %v266 = vxor.u32 %v258, 2147483648
    %v267 = vxor.u32 %v259, 2147483648
    %v268 = vxor.u32 %v260, 2147483648
    %v269 = vxor.u32 %v261, 2147483648
    %v270 = vxor.u32 %v262, 2147483648
    %v271 = vxor.u32 %v263, 2147483648
    %v272 = vxor.u32 %v264, 2147483648
    %v273 = vxor.u32 %v265, 2147483648
    %v274 = vmul.f32 %v266, 1.442695
    %v275 = vpow.pop %v274
    %v276 = vmul.f32 %v267, 1.442695
    %v277 = vpow.pop %v276
    %v278 = vmul.f32 %v268, 1.442695
    %v279 = vpow.pop %v278
    %v280 = vmul.f32 %v269, 1.442695
    %v281 = vpow.pop %v280
    %v282 = vmul.f32 %v270, 1.442695
    %v283 = vpow.pop %v282
    %v284 = vmul.f32 %v271, 1.442695
    %v285 = vpow.pop %v284
    %v286 = vmul.f32 %v272, 1.442695
    %v287 = vpow.pop %v286
    %v288 = vmul.f32 %v273, 1.442695
    %v289 = vpow.pop %v288
    %v290 = vadd.f32 %v275, 1.0
    %v291 = vadd.f32 %v277, 1.0
    %v292 = vadd.f32 %v279, 1.0
    %v293 = vadd.f32 %v281, 1.0
    %v294 = vadd.f32 %v283, 1.0
    %v295 = vadd.f32 %v285, 1.0
    %v296 = vadd.f32 %v287, 1.0
    %v297 = vadd.f32 %v289, 1.0
    %v298 = vrcp.pop %v290
    %v299 = vmul.f32 1.0, %v298
    %v300 = vrcp.pop %v291
    %v301 = vmul.f32 1.0, %v300
    %v302 = vrcp.pop %v292
    %v303 = vmul.f32 1.0, %v302
    %v304 = vrcp.pop %v293
    %v305 = vmul.f32 1.0, %v304
    %v306 = vrcp.pop %v294
    %v307 = vmul.f32 1.0, %v306
    %v308 = vrcp.pop %v295
    %v309 = vmul.f32 1.0, %v308
    %v310 = vrcp.pop %v296
    %v311 = vmul.f32 1.0, %v310
    %v312 = vrcp.pop %v297
    %v313 = vmul.f32 1.0, %v312
    %315 = vset.pattern.permute.xlu0 4
    %316 = vperm.xlu0 %315, %v299
    %v317 = vpop.permute.xlu0 %316
    %320 = vset.pattern.permute.xlu0 4
    %321 = vperm.xlu0 %320, %v301
    %v322 = vpop.permute.xlu0 %321
    %325 = vset.pattern.permute.xlu0 4
    %326 = vperm.xlu0 %325, %v303
    %v327 = vpop.permute.xlu0 %326
    %330 = vset.pattern.permute.xlu0 4
    %331 = vperm.xlu0 %330, %v305
    %v332 = vpop.permute.xlu0 %331
    %335 = vset.pattern.permute.xlu0 4
    %336 = vperm.xlu0 %335, %v307
    %v337 = vpop.permute.xlu0 %336
    %340 = vset.pattern.permute.xlu0 4
    %341 = vperm.xlu0 %340, %v309
    %v342 = vpop.permute.xlu0 %341
    %345 = vset.pattern.permute.xlu0 4
    %346 = vperm.xlu0 %345, %v311
    %v347 = vpop.permute.xlu0 %346
    %350 = vset.pattern.permute.xlu0 4
    %351 = vperm.xlu0 %350, %v313
    %v352 = vpop.permute.xlu0 %351
    %v354 = vmul.f32 %v29, %v317
    %v355 = vmul.f32 %v30, %v322
    %v356 = vmul.f32 %v31, %v327
    %v357 = vmul.f32 %v32, %v332
    %v358 = vmul.f32 %v33, %v337
    %v359 = vmul.f32 %v34, %v342
    %v360 = vmul.f32 %v35, %v347
    %v361 = vmul.f32 %v36, %v352
    %362 = vst [vmem:[#allocation5] sm:$0xff] %v354
    %363 = vst [vmem:[#allocation5 + $0x8] sm:$0xff] %v355
    %364 = vst [vmem:[#allocation5 + $0x10] sm:$0xff] %v356
    %365 = vst [vmem:[#allocation5 + $0x18] sm:$0xff] %v357
    %366 = vst [vmem:[#allocation5 + $0x20] sm:$0xff] %v358
    %367 = vst [vmem:[#allocation5 + $0x28] sm:$0xff] %v359
    %368 = vst [vmem:[#allocation5 + $0x30] sm:$0xff] %v360
    %369 = vst [vmem:[#allocation5 + $0x38] sm:$0xff] %v361
    // Predicated region
    $region18: #{tpu_custom_call.1} parent=1 // pred_check
      _
    $region19: #{tpu_custom_call.1} parent=1 // pred_check_branch
      %371 = sbr.rel (0) target = $region21
    $region20: #{tpu_custom_call.1} parent=1 // pred_region
      %s373 = ssub.s32 1024, 1024
      %374 = vsyncadd [#allocation4], %s373
      %s375 = sshll.u32 [#allocation5], 4
      %s376 = int_to_ptr.vmem [resolvable:$true] %s375
      %381 = dma.vmem_to_hbm [thread:$0]  %s376, 1024, %s3, [#allocation4], 128, 128, 8
    $region21: #{tpu_custom_call.1} parent=1 // pred_fallthru
      _
    // Predicated region
    $region22: #{tpu_custom_call.1} parent=1 // pred_check
      _
    $region23: #{tpu_custom_call.1} parent=1 // pred_check_branch
      %383 = sbr.rel (0) target = $region25
    $region24: #{tpu_custom_call.1} parent=1 // pred_region
      %384 = dma.done [#allocation4], 1024
    $region25: #{tpu_custom_call.1} parent=1 // pred_fallthru
      _
    %385 = vsyncpa [#allocation3], 1
    %386 = vsyncpa [#allocation4], 1

</llo_original>
